<compile_context>
chip_gen: v7x
topology: tpu7x:2x2x1
jax: 0.10.0
libtpu: 0.0.40
codegen_flags: <defaults>
</compile_context>

<pallas_src>
import jax
import jax.numpy as jnp
from jax.experimental import pallas as pl
from jax.experimental.pallas import tpu as pltpu

_LANE = 128          # lane alignment
_SUBLANE = 8         # f32 sublane alignment
_VMEM_LIMIT = 48 * 1024 * 1024   # fits v7x's 64 MiB physical VMEM, > v5e's 16 MiB default


def _round_up(x, m):
    return ((x + m - 1) // m) * m


def _largest_divisor_leq(n, cap):
    d = max(1, min(cap, n))
    while n % d:
        d -= 1
    return d


def _pad2(x, rows, cols):
    return jnp.pad(x, ((0, rows - x.shape[0]), (0, cols - x.shape[1])))


# ---------------------------------------------------------------------------
# Kernels
# ---------------------------------------------------------------------------
def _tower_kernel(x_ref, w1_ref, b1_ref, w2_ref, b2_ref, emb_f32_ref, emb_bf16_ref):
    """2-layer MLP tower for one batch tile: relu(x @ W1 + b1) @ W2 + b2.

    x / W1 / W2 are bf16 (MXU inputs); accumulation, bias add and ReLU are f32.
    Emits the f32 embedding (returned to the caller) and a bf16 copy that the
    scoring kernel consumes directly (halves its HBM read traffic).
    """
    h = jnp.dot(x_ref[...], w1_ref[...], preferred_element_type=jnp.float32)
    h = jnp.maximum(h + b1_ref[...], 0.0)
    e = jnp.dot(h.astype(w2_ref.dtype), w2_ref[...],
                preferred_element_type=jnp.float32) + b2_ref[...]
    emb_f32_ref[...] = e
    emb_bf16_ref[...] = e.astype(jnp.bfloat16)


def _score_kernel(u_ref, i_ref, s_ref):
    """scores = user_emb_tile @ item_emb_tile.T as an NT GEMM (no transpose op).

    Inputs are already bf16 (written by the tower kernels), so no per-tile cast.
    """
    s_ref[...] = jax.lax.dot_general(
        u_ref[...], i_ref[...],
        dimension_numbers=(((1,), (1,)), ((), ())),   # contract last dim of both
        preferred_element_type=jnp.float32)


# ---------------------------------------------------------------------------
# pallas_call wrappers
# ---------------------------------------------------------------------------
def _mlp_tower(x_bf16, w1, b1, w2, b2, batch_tile):
    bp, fp = x_bf16.shape
    hp = w1.shape[1]
    ep = w2.shape[1]
    grid = (bp // batch_tile,)
    return pl.pallas_call(
        _tower_kernel,
        out_shape=(jax.ShapeDtypeStruct((bp, ep), jnp.float32),
                   jax.ShapeDtypeStruct((bp, ep), jnp.bfloat16)),
        grid_spec=pltpu.PrefetchScalarGridSpec(
            num_scalar_prefetch=0,
            grid=grid,
            in_specs=[
                pl.BlockSpec((batch_tile, fp), lambda i: (i, 0)),
                pl.BlockSpec((fp, hp), lambda i: (0, 0)),   # weights resident
                pl.BlockSpec((1, hp), lambda i: (0, 0)),
                pl.BlockSpec((hp, ep), lambda i: (0, 0)),
                pl.BlockSpec((1, ep), lambda i: (0, 0)),
            ],
            out_specs=(pl.BlockSpec((batch_tile, ep), lambda i: (i, 0)),
                       pl.BlockSpec((batch_tile, ep), lambda i: (i, 0))),
        ),
        compiler_params=pltpu.CompilerParams(
            dimension_semantics=("parallel",),
            vmem_limit_bytes=_VMEM_LIMIT),
    )(x_bf16, w1, b1, w2, b2)


def _score_resident_users(user_emb_bf16, item_emb_bf16, ti):
    """Whole user_emb resident in VMEM; grid over item tiles only, so item_emb
    is streamed from HBM exactly once."""
    up, ep = user_emb_bf16.shape
    ip, _ = item_emb_bf16.shape
    grid = (ip // ti,)
    return pl.pallas_call(
        _score_kernel,
        out_shape=jax.ShapeDtypeStruct((up, ip), jnp.float32),
        grid_spec=pltpu.PrefetchScalarGridSpec(
            num_scalar_prefetch=0,
            grid=grid,
            in_specs=[
                pl.BlockSpec((up, ep), lambda j: (0, 0)),    # resident users
                pl.BlockSpec((ti, ep), lambda j: (j, 0)),
            ],
            out_specs=pl.BlockSpec((up, ti), lambda j: (0, j)),
        ),
        compiler_params=pltpu.CompilerParams(
            dimension_semantics=("parallel",),
            vmem_limit_bytes=_VMEM_LIMIT),
    )(user_emb_bf16, item_emb_bf16)


def _score_tiled(user_emb_bf16, item_emb_bf16, tu, ti):
    """Fallback 2-D (user_tile x item_tile) scoring grid for very large user batches."""
    up, ep = user_emb_bf16.shape
    ip, _ = item_emb_bf16.shape
    grid = (up // tu, ip // ti)
    return pl.pallas_call(
        _score_kernel,
        out_shape=jax.ShapeDtypeStruct((up, ip), jnp.float32),
        grid_spec=pltpu.PrefetchScalarGridSpec(
            num_scalar_prefetch=0,
            grid=grid,
            in_specs=[
                pl.BlockSpec((tu, ep), lambda i, j: (i, 0)),
                pl.BlockSpec((ti, ep), lambda i, j: (j, 0)),
            ],
            out_specs=pl.BlockSpec((tu, ti), lambda i, j: (i, j)),
        ),
        compiler_params=pltpu.CompilerParams(
            dimension_semantics=("parallel", "parallel"),
            vmem_limit_bytes=_VMEM_LIMIT),
    )(user_emb_bf16, item_emb_bf16)


# ---------------------------------------------------------------------------
# Forward pass
# ---------------------------------------------------------------------------
def two_tower_forward(items, users, interactions, params, *,
                      max_item_tile=2048, max_batch_tile=1024,
                      max_resident_users=1024, max_user_tile=512):
    """items: [I, item_feat], users: [U, user_feat], interactions: [U, I].

    Returns (scores [U, I], item_emb [I, emb_dim], user_emb [U, emb_dim]).
    """
    # TODO(synk): reference forward() body is `pass`; `interactions` has no
    # defined use, so it is accepted but not consumed by the kernels.
    del interactions

    num_items, item_feat = items.shape
    num_users, user_feat = users.shape
    hidden = params["iw1"].shape[1]
    emb_dim = params["iw2"].shape[1]

    # Lane-aligned feature / hidden / embedding dims.
    if_p = _round_up(item_feat, _LANE)
    uf_p = _round_up(user_feat, _LANE)
    h_p = _round_up(hidden, _LANE)
    e_p = _round_up(emb_dim, _LANE)

    # --- item-side tiling: pad only to the 128-lane minimum, then pick tiles
    # that are 128-multiples *and* divide the padded size (no extra padding).
    i_p = _round_up(num_items, _LANE)
    ni = i_p // _LANE
    ti = _LANE * _largest_divisor_leq(ni, max(1, max_item_tile // _LANE))
    tb_items = _LANE * _largest_divisor_leq(ni, max(1, max_batch_tile // _LANE))

    # --- user-side tiling.
    resident_users = _round_up(num_users, _SUBLANE) <= max_resident_users
    if resident_users:
        # Whole (padded) user batch handled as one resident block.
        # TODO(synk): single-step user-tower grid leaves one v7x TensorCore idle;
        #             negligible here, fuse into the score kernel if it matters.
        u_p = _round_up(num_users, _SUBLANE)
        tb_users = u_p
        tu = u_p
    else:
        u_p = _round_up(num_users, _LANE)
        nu = u_p // _LANE
        tu = _LANE * _largest_divisor_leq(nu, max(1, max_user_tile // _LANE))
        tb_users = _LANE * _largest_divisor_leq(nu, max(1, max_batch_tile // _LANE))

    # Zero-pad everything: padded weight columns / rows and bias entries are
    # exact zeros, so the real region of every output is exact; padding is
    # sliced off below.
    bf = jnp.bfloat16
    items_p = _pad2(items, i_p, if_p).astype(bf)
    users_p = _pad2(users, u_p, uf_p).astype(bf)
    iw1 = _pad2(params["iw1"], if_p, h_p).astype(bf)
    iw2 = _pad2(params["iw2"], h_p, e_p).astype(bf)
    uw1 = _pad2(params["uw1"], uf_p, h_p).astype(bf)
    uw2 = _pad2(params["uw2"], h_p, e_p).astype(bf)
    ib1 = _pad2(params["ib1"], 1, h_p)
    ib2 = _pad2(params["ib2"], 1, e_p)
    ub1 = _pad2(params["ub1"], 1, h_p)
    ub2 = _pad2(params["ub2"], 1, e_p)

    item_emb_p, item_emb_bf16 = _mlp_tower(items_p, iw1, ib1, iw2, ib2, tb_items)
    user_emb_p, user_emb_bf16 = _mlp_tower(users_p, uw1, ub1, uw2, ub2, tb_users)

    if resident_users:
        scores_p = _score_resident_users(user_emb_bf16, item_emb_bf16, ti)
    else:
        scores_p = _score_tiled(user_emb_bf16, item_emb_bf16, tu, ti)

    scores = scores_p[:num_users, :num_items]
    item_emb = item_emb_p[:num_items, :emb_dim]
    user_emb = user_emb_p[:num_users, :emb_dim]
    return scores, item_emb, user_emb


# ---------------------------------------------------------------------------
# Parameters and reference
# ---------------------------------------------------------------------------
def init_params(key, item_feat, user_feat, hidden, emb_dim):
    """Deterministic synthetic parameters. Biases kept 2D [1, out] so every
    array entering a kernel is >=2D for TPU layout."""
    ks = jax.random.split(key, 8)

    def lin(k, fan_in, fan_out):
        scale = 1.0 / jnp.sqrt(jnp.float32(fan_in))
        return jax.random.uniform(k, (fan_in, fan_out), jnp.float32, -scale, scale)

    return {
        "iw1": lin(ks[0], item_feat, hidden),
        "ib1": jax.random.uniform(ks[1], (1, hidden), jnp.float32, -0.1, 0.1),
        "iw2": lin(ks[2], hidden, emb_dim),
        "ib2": jax.random.uniform(ks[3], (1, emb_dim), jnp.float32, -0.1, 0.1),
        "uw1": lin(ks[4], user_feat, hidden),
        "ub1": jax.random.uniform(ks[5], (1, hidden), jnp.float32, -0.1, 0.1),
        "uw2": lin(ks[6], hidden, emb_dim),
        "ub2": jax.random.uniform(ks[7], (1, emb_dim), jnp.float32, -0.1, 0.1),
    }


def two_tower_ref(items, users, params):
    """Pure-JAX reference mirroring the kernel's bf16-matmul / f32-accumulate math."""
    bf = jnp.bfloat16

    def tower(x, w1, b1, w2, b2):
        h = jnp.dot(x.astype(bf), w1.astype(bf), preferred_element_type=jnp.float32)
        h = jnp.maximum(h + b1, 0.0)
        return jnp.dot(h.astype(bf), w2.astype(bf),
                       preferred_element_type=jnp.float32) + b2

    e_i = tower(items, params["iw1"], params["ib1"], params["iw2"], params["ib2"])
    e_u = tower(users, params["uw1"], params["ub1"], params["uw2"], params["ub2"])
    scores = jax.lax.dot_general(
        e_u.astype(bf), e_i.astype(bf),
        dimension_numbers=(((1,), (1,)), ((), ())),
        preferred_element_type=jnp.float32)
    return scores, e_i, e_u


if __name__ == "__main__":
    key = jax.random.PRNGKey(0)
    k_items, k_users, k_inter, k_params = jax.random.split(key, 4)

    num_items, num_users = 160, 24
    item_feat, user_feat, hidden, emb_dim = 16, 32, 32, 32

    processed_items = jax.random.normal(k_items, (num_items, item_feat), jnp.float32)
    processed_users = jax.random.normal(k_users, (num_users, user_feat), jnp.float32)
    processed_real_interactions = (
        jax.random.uniform(k_inter, (num_users, num_items)) > 0.5
    ).astype(jnp.float32)

    params = init_params(k_params, item_feat, user_feat, hidden, emb_dim)

    ref_scores, ref_item_emb, ref_user_emb = two_tower_ref(
        processed_items, processed_users, params
    )

    # Run twice: (1) production defaults (large tiles, resident-user scoring),
    # (2) tiny tile caps to exercise multi-step tower grids and the 2-D tiled
    # scoring fallback.
    configs = [
        dict(),
        dict(max_item_tile=128, max_batch_tile=128, max_resident_users=8),
    ]
    for cfg in configs:
        scores, item_emb, user_emb = two_tower_forward(
            processed_items, processed_users, processed_real_interactions,
            params, **cfg
        )
        jax.block_until_ready((scores, item_emb, user_emb))

        # bf16 MXU inputs (f32 accumulation) => compare at bf16-level tolerance.
        assert jnp.allclose(scores, ref_scores, atol=1e-2, rtol=1e-2)
        assert jnp.allclose(item_emb, ref_item_emb, atol=1e-2, rtol=1e-2)
        assert jnp.allclose(user_emb, ref_user_emb, atol=1e-2, rtol=1e-2)

    print("KERNEL_OK")
</pallas_src>

<mosaic_0001>
module attributes {stable_mosaic.version = 11 : i64} {
  func.func @_tower_kernel(%arg0: i32, %arg1: memref<256x128xbf16, #tpu.memory_space<vmem>>, %arg2: memref<128x128xbf16, #tpu.memory_space<vmem>>, %arg3: memref<1x128xf32, #tpu.memory_space<vmem>>, %arg4: memref<128x128xbf16, #tpu.memory_space<vmem>>, %arg5: memref<1x128xf32, #tpu.memory_space<vmem>>, %arg6: memref<256x128xf32, #tpu.memory_space<vmem>>, %arg7: memref<256x128xbf16, #tpu.memory_space<vmem>>) attributes {dimension_semantics = [#tpu.dimension_semantics<parallel>], iteration_bounds = array<i64: 1>, scalar_prefetch = 0 : i64, scratch_operands = 0 : i64, tpu.core_type = #tpu.core_type<tc>, window_params = [{transform_indices = @transform_0, window_bounds = array<i64: 256, 128>}, {pipeline_mode = #tpu.pipeline_mode<synchronous>, transform_indices = @transform_1, window_bounds = array<i64: 128, 128>}, {pipeline_mode = #tpu.pipeline_mode<synchronous>, transform_indices = @transform_2, window_bounds = array<i64: 1, 128>}, {pipeline_mode = #tpu.pipeline_mode<synchronous>, transform_indices = @transform_3, window_bounds = array<i64: 128, 128>}, {pipeline_mode = #tpu.pipeline_mode<synchronous>, transform_indices = @transform_4, window_bounds = array<i64: 1, 128>}, {transform_indices = @transform_5, window_bounds = array<i64: 256, 128>}, {transform_indices = @transform_6, window_bounds = array<i64: 256, 128>}]} {
    %c0 = arith.constant 0 : index
    %c0_0 = arith.constant 0 : index
    %0 = vector.load %arg1[%c0, %c0_0] : memref<256x128xbf16, #tpu.memory_space<vmem>>, vector<256x128xbf16>
    %c0_1 = arith.constant 0 : index
    %c0_2 = arith.constant 0 : index
    %1 = vector.load %arg2[%c0_1, %c0_2] : memref<128x128xbf16, #tpu.memory_space<vmem>>, vector<128x128xbf16>
    %cst = arith.constant dense<0.000000e+00> : vector<256x128xf32>
    %2 = tpu.matmul %0, %1, %cst {dimension_numbers = #tpu.dot_dimension_numbers<[1], [0], [0], [1], [0, 0, 1, 1], [], []>} : vector<256x128xbf16>, vector<128x128xbf16>, vector<256x128xf32> -> vector<256x128xf32>
    %c0_3 = arith.constant 0 : index
    %c0_4 = arith.constant 0 : index
    %3 = vector.load %arg3[%c0_3, %c0_4] : memref<1x128xf32, #tpu.memory_space<vmem>>, vector<1x128xf32>
    %4 = vector.broadcast %3 : vector<1x128xf32> to vector<256x128xf32>
    %5 = arith.addf %2, %4 : vector<256x128xf32>
    %cst_5 = arith.constant 0.000000e+00 : f32
    %6 = vector.broadcast %cst_5 : f32 to vector<256x128xf32>
    %7 = arith.maximumf %5, %6 : vector<256x128xf32>
    %8 = arith.truncf %7 : vector<256x128xf32> to vector<256x128xbf16>
    %c0_6 = arith.constant 0 : index
    %c0_7 = arith.constant 0 : index
    %9 = vector.load %arg4[%c0_6, %c0_7] : memref<128x128xbf16, #tpu.memory_space<vmem>>, vector<128x128xbf16>
    %cst_8 = arith.constant dense<0.000000e+00> : vector<256x128xf32>
    %10 = tpu.matmul %8, %9, %cst_8 {dimension_numbers = #tpu.dot_dimension_numbers<[1], [0], [0], [1], [0, 0, 1, 1], [], []>} : vector<256x128xbf16>, vector<128x128xbf16>, vector<256x128xf32> -> vector<256x128xf32>
    %c0_9 = arith.constant 0 : index
    %c0_10 = arith.constant 0 : index
    %11 = vector.load %arg5[%c0_9, %c0_10] : memref<1x128xf32, #tpu.memory_space<vmem>>, vector<1x128xf32>
    %12 = vector.broadcast %11 : vector<1x128xf32> to vector<256x128xf32>
    %13 = arith.addf %10, %12 : vector<256x128xf32>
    %c0_11 = arith.constant 0 : index
    %c0_12 = arith.constant 0 : index
    %14 = vector.load %arg6[%c0_11, %c0_12] : memref<256x128xf32, #tpu.memory_space<vmem>>, vector<256x128xf32>
    tpu.vector_store %arg6[%c0_11, %c0_12], %13 {strides = array<i32>} : memref<256x128xf32, #tpu.memory_space<vmem>>, vector<256x128xf32>,
    %15 = arith.truncf %13 : vector<256x128xf32> to vector<256x128xbf16>
    %c0_13 = arith.constant 0 : index
    %c0_14 = arith.constant 0 : index
    %16 = vector.load %arg7[%c0_13, %c0_14] : memref<256x128xbf16, #tpu.memory_space<vmem>>, vector<256x128xbf16>
    tpu.vector_store %arg7[%c0_13, %c0_14], %15 {strides = array<i32>} : memref<256x128xbf16, #tpu.memory_space<vmem>>, vector<256x128xbf16>,
    return
  }
  func.func @transform_0(%arg0: i32) -> (i32, i32) {
    %c0_i32 = arith.constant 0 : i32
    %c0_i32_0 = arith.constant 0 : i32
    return %arg0, %c0_i32 : i32, i32
  }
  func.func @transform_1(%arg0: i32) -> (i32, i32) {
    %c0_i32 = arith.constant 0 : i32
    %c0_i32_0 = arith.constant 0 : i32
    %c0_i32_1 = arith.constant 0 : i32
    return %c0_i32, %c0_i32_0 : i32, i32
  }
  func.func @transform_2(%arg0: i32) -> (i32, i32) {
    %c0_i32 = arith.constant 0 : i32
    %c0_i32_0 = arith.constant 0 : i32
    %c0_i32_1 = arith.constant 0 : i32
    return %c0_i32, %c0_i32_0 : i32, i32
  }
  func.func @transform_3(%arg0: i32) -> (i32, i32) {
    %c0_i32 = arith.constant 0 : i32
    %c0_i32_0 = arith.constant 0 : i32
    %c0_i32_1 = arith.constant 0 : i32
    return %c0_i32, %c0_i32_0 : i32, i32
  }
  func.func @transform_4(%arg0: i32) -> (i32, i32) {
    %c0_i32 = arith.constant 0 : i32
    %c0_i32_0 = arith.constant 0 : i32
    %c0_i32_1 = arith.constant 0 : i32
    return %c0_i32, %c0_i32_0 : i32, i32
  }
  func.func @transform_5(%arg0: i32) -> (i32, i32) {
    %c0_i32 = arith.constant 0 : i32
    %c0_i32_0 = arith.constant 0 : i32
    return %arg0, %c0_i32 : i32, i32
  }
  func.func @transform_6(%arg0: i32) -> (i32, i32) {
    %c0_i32 = arith.constant 0 : i32
    %c0_i32_0 = arith.constant 0 : i32
    return %arg0, %c0_i32 : i32, i32
  }
}

</mosaic_0001>

<llo_original>
// kernel: tpu_custom_call.1
$region0: #{tpu_custom_call.1}
  #allocation0 [shape = 'u32[]', space=smem, size = 0x4, offset = 0x4, fixed_abs, tag = 'smem constant byte address 0x4 - core index']
  #allocation1 [shape = 'u32[144,128]{1,0:T(1,128)}', space=vmem, size = 0x12000, scoped, tag = 'internal scratch']
  %s0 = inlined_call_operand.hbm [shape: bf16[256,128], index: 0, kind: input, shape index: {}]
  %s1 = inlined_call_operand.hbm [shape: bf16[128,128], index: 1, kind: input, shape index: {}]
  %s2 = inlined_call_operand.vmem [shape: f32[1,128], index: 2, kind: input, shape index: {}]
  %s3 = inlined_call_operand.hbm [shape: bf16[128,128], index: 3, kind: input, shape index: {}]
  %s4 = inlined_call_operand.vmem [shape: f32[1,128], index: 4, kind: input, shape index: {}]
  %s5 = inlined_call_operand.hbm [shape: f32[256,128], index: 5, kind: output, shape index: {0}]
  %s6 = inlined_call_operand.hbm [shape: bf16[256,128], index: 6, kind: output, shape index: {1}]
  %7 = xla_tuple %s5, %s6
  %s8 = sld [smem:[#allocation0]]
  $region50: #{tpu_custom_call.1} parent=0
    _
  %s10 = ssub.s32 1, %s8
  %s11 = scalar_select 0, %s10, %s8
  $region1: #{tpu_custom_call.1} parent=0
    #allocation2 [shape = 'u8[65536]{0}', space=vmem, size = 0x10000, scoped, tag = 'input window, operand 0, single buffered']
    #allocation3 [shape = 's32[1]{0}', space=sflag, size = 0x4, scoped, tag = 'scoped memory for tpu_custom_call.1']
    #allocation4 [shape = 's32[1]{0}', space=sflag, size = 0x4, scoped, tag = 'scoped memory for tpu_custom_call.1']
    #allocation5 [shape = 'u8[32768]{0}', space=vmem, size = 0x8000, scoped, tag = 'input window, operand 1, single buffered']
    #allocation6 [shape = 's32[1]{0}', space=sflag, size = 0x4, scoped, tag = 'scoped memory for tpu_custom_call.1']
    #allocation7 [shape = 'u8[32768]{0}', space=vmem, size = 0x8000, scoped, tag = 'input window, operand 3, single buffered']
    #allocation8 [shape = 'u8[131072]{0}', space=vmem, size = 0x20000, scoped, tag = 'output window, operand 0, single buffered']
    #allocation9 [shape = 'u8[65536]{0}', space=vmem, size = 0x10000, scoped, tag = 'output window, operand 1, single buffered']
    #allocation10 [shape = 's32[1]{0}', space=sflag, size = 0x4, scoped, tag = 'scoped memory for tpu_custom_call.1']
    %12 = vsyncpa [#allocation3], 0
    %13 = vsyncpa [#allocation6], 0
    %14 = vsyncpa [#allocation4], 0
    %15 = vsyncpa [#allocation10], 0
    // Predicated region
    $region2: #{tpu_custom_call.1} parent=1 // pred_check
      _
    $region3: #{tpu_custom_call.1} parent=1 // pred_check_branch
      %17 = sbr.rel (0) target = $region5
    $region4: #{tpu_custom_call.1} parent=1 // pred_region
      %s19 = ssub.s32 2048, 2048
      %20 = vsyncadd [#allocation3], %s19
      %s21 = sshll.u32 [#allocation2], 4
      %s22 = int_to_ptr.vmem [resolvable:$true] %s21
      %27 = dma.hbm_to_vmem [thread:$0]  %s0, 2048, %s22, [#allocation3], 64, 64, 4
    $region5: #{tpu_custom_call.1} parent=1 // pred_fallthru
      _
    // Predicated region
    $region6: #{tpu_custom_call.1} parent=1 // pred_check
      _
    $region7: #{tpu_custom_call.1} parent=1 // pred_check_branch
      %29 = sbr.rel (0) target = $region9
    $region8: #{tpu_custom_call.1} parent=1 // pred_region
      %s31 = ssub.s32 1024, 1024
      %32 = vsyncadd [#allocation6], %s31
      %s33 = sshll.u32 [#allocation5], 4
      %s34 = int_to_ptr.vmem [resolvable:$true] %s33
      %39 = dma.hbm_to_vmem [thread:$0]  %s1, 1024, %s34, [#allocation6], 64, 64, 4
    $region9: #{tpu_custom_call.1} parent=1 // pred_fallthru
      _
    // Predicated region
    $region10: #{tpu_custom_call.1} parent=1 // pred_check
      _
    $region11: #{tpu_custom_call.1} parent=1 // pred_check_branch
      %41 = sbr.rel (0) target = $region13
    $region12: #{tpu_custom_call.1} parent=1 // pred_region
      _
    $region13: #{tpu_custom_call.1} parent=1 // pred_fallthru
      _
    // Predicated region
    $region14: #{tpu_custom_call.1} parent=1 // pred_check
      _
    $region15: #{tpu_custom_call.1} parent=1 // pred_check_branch
      %43 = sbr.rel (0) target = $region17
    $region16: #{tpu_custom_call.1} parent=1 // pred_region
      %s45 = ssub.s32 1024, 1024
      %46 = vsyncadd [#allocation6], %s45
      %s47 = sshll.u32 [#allocation7], 4
      %s48 = int_to_ptr.vmem [resolvable:$true] %s47
      %53 = dma.hbm_to_vmem [thread:$0]  %s3, 1024, %s48, [#allocation6], 64, 64, 4
    $region17: #{tpu_custom_call.1} parent=1 // pred_fallthru
      _
    // Predicated region
    $region18: #{tpu_custom_call.1} parent=1 // pred_check
      _
    $region19: #{tpu_custom_call.1} parent=1 // pred_check_branch
      %55 = sbr.rel (0) target = $region21
    $region20: #{tpu_custom_call.1} parent=1 // pred_region
      _
    $region21: #{tpu_custom_call.1} parent=1 // pred_fallthru
      _
    // Predicated region
    $region22: #{tpu_custom_call.1} parent=1 // pred_check
      _
    $region23: #{tpu_custom_call.1} parent=1 // pred_check_branch
      %57 = sbr.rel (0) target = $region25
    $region24: #{tpu_custom_call.1} parent=1 // pred_region
      %58 = dma.done [#allocation3], 2048
    $region25: #{tpu_custom_call.1} parent=1 // pred_fallthru
      _
    // Predicated region
    $region26: #{tpu_custom_call.1} parent=1 // pred_check
      _
    $region27: #{tpu_custom_call.1} parent=1 // pred_check_branch
      %60 = sbr.rel (0) target = $region29
    $region28: #{tpu_custom_call.1} parent=1 // pred_region
      %61 = dma.done [#allocation6], 1024
    $region29: #{tpu_custom_call.1} parent=1 // pred_fallthru
      _
    // Predicated region
    $region30: #{tpu_custom_call.1} parent=1 // pred_check
      _
    $region31: #{tpu_custom_call.1} parent=1 // pred_check_branch
      %63 = sbr.rel (0) target = $region33
    $region32: #{tpu_custom_call.1} parent=1 // pred_region
      %64 = dma.done [#allocation6], 1024
    $region33: #{tpu_custom_call.1} parent=1 // pred_fallthru
      _
    %v66 = vld [vmem:[#allocation2] sm:$0xf]
    %v67 = vld [vmem:[#allocation2 + $0x4] sm:$0xf]
    %v68 = vld [vmem:[#allocation2 + $0x8] sm:$0xf]
    %v69 = vld [vmem:[#allocation2 + $0xc] sm:$0xf]
    %v70 = vld [vmem:[#allocation2 + $0x10] sm:$0xf]
    %v71 = vld [vmem:[#allocation2 + $0x14] sm:$0xf]
    %v72 = vld [vmem:[#allocation2 + $0x18] sm:$0xf]
    %v73 = vld [vmem:[#allocation2 + $0x1c] sm:$0xf]
    %v74 = vld [vmem:[#allocation2 + $0x20] sm:$0xf]
    %v75 = vld [vmem:[#allocation2 + $0x24] sm:$0xf]
    %v76 = vld [vmem:[#allocation2 + $0x28] sm:$0xf]
    %v77 = vld [vmem:[#allocation2 + $0x2c] sm:$0xf]
    %v78 = vld [vmem:[#allocation2 + $0x30] sm:$0xf]
    %v79 = vld [vmem:[#allocation2 + $0x34] sm:$0xf]
    %v80 = vld [vmem:[#allocation2 + $0x38] sm:$0xf]
    %v81 = vld [vmem:[#allocation2 + $0x3c] sm:$0xf]
    %v82 = vld [vmem:[#allocation2 + $0x40] sm:$0xf]
    %v83 = vld [vmem:[#allocation2 + $0x44] sm:$0xf]
    %v84 = vld [vmem:[#allocation2 + $0x48] sm:$0xf]
    %v85 = vld [vmem:[#allocation2 + $0x4c] sm:$0xf]
    %v86 = vld [vmem:[#allocation2 + $0x50] sm:$0xf]
    %v87 = vld [vmem:[#allocation2 + $0x54] sm:$0xf]
    %v88 = vld [vmem:[#allocation2 + $0x58] sm:$0xf]
    %v89 = vld [vmem:[#allocation2 + $0x5c] sm:$0xf]
    %v90 = vld [vmem:[#allocation2 + $0x60] sm:$0xf]
    %v91 = vld [vmem:[#allocation2 + $0x64] sm:$0xf]
    %v92 = vld [vmem:[#allocation2 + $0x68] sm:$0xf]
    %v93 = vld [vmem:[#allocation2 + $0x6c] sm:$0xf]
    %v94 = vld [vmem:[#allocation2 + $0x70] sm:$0xf]
    %v95 = vld [vmem:[#allocation2 + $0x74] sm:$0xf]
    %v96 = vld [vmem:[#allocation2 + $0x78] sm:$0xf]
    %v97 = vld [vmem:[#allocation2 + $0x7c] sm:$0xf]
    %v98 = vld [vmem:[#allocation5] sm:$0xf]
    %v99 = vld [vmem:[#allocation5 + $0x4] sm:$0xf]
    %v100 = vld [vmem:[#allocation5 + $0x8] sm:$0xf]
    %v101 = vld [vmem:[#allocation5 + $0xc] sm:$0xf]
    %v102 = vld [vmem:[#allocation5 + $0x10] sm:$0xf]
    %v103 = vld [vmem:[#allocation5 + $0x14] sm:$0xf]
    %v104 = vld [vmem:[#allocation5 + $0x18] sm:$0xf]
    %v105 = vld [vmem:[#allocation5 + $0x1c] sm:$0xf]
    %v106 = vld [vmem:[#allocation5 + $0x20] sm:$0xf]
    %v107 = vld [vmem:[#allocation5 + $0x24] sm:$0xf]
    %v108 = vld [vmem:[#allocation5 + $0x28] sm:$0xf]
    %v109 = vld [vmem:[#allocation5 + $0x2c] sm:$0xf]
    %v110 = vld [vmem:[#allocation5 + $0x30] sm:$0xf]
    %v111 = vld [vmem:[#allocation5 + $0x34] sm:$0xf]
    %v112 = vld [vmem:[#allocation5 + $0x38] sm:$0xf]
    %v113 = vld [vmem:[#allocation5 + $0x3c] sm:$0xf]
    %v114 = vld [vmem:[%s2] sm:$0x1]
    %v116 = vlaneseq
    %v117 = vshrl.u32 %v116, 7
    %v118 = vsub.s32 0, %v117
    %v119 = vrot.slane %v114, %v118
    %v153 = vunpack.c.l.b16 %v66
    %v154 = vunpack.c.l.b16 %v67
    %v155 = vunpack.c.l.b16 %v68
    %v156 = vunpack.c.l.b16 %v69
    %v157 = vunpack.c.l.b16 %v70
    %v158 = vunpack.c.l.b16 %v71
    %v159 = vunpack.c.l.b16 %v72
    %v160 = vunpack.c.l.b16 %v73
    %v161 = vunpack.c.l.b16 %v74
    %v162 = vunpack.c.l.b16 %v75
    %v163 = vunpack.c.l.b16 %v76
    %v164 = vunpack.c.l.b16 %v77
    %v165 = vunpack.c.l.b16 %v78
    %v166 = vunpack.c.l.b16 %v79
    %v167 = vunpack.c.l.b16 %v80
    %v168 = vunpack.c.l.b16 %v81
    %v169 = vunpack.c.l.b16 %v82
    %v170 = vunpack.c.l.b16 %v83
    %v171 = vunpack.c.l.b16 %v84
    %v172 = vunpack.c.l.b16 %v85
    %v173 = vunpack.c.l.b16 %v86
    %v174 = vunpack.c.l.b16 %v87
    %v175 = vunpack.c.l.b16 %v88
    %v176 = vunpack.c.l.b16 %v89
    %v177 = vunpack.c.l.b16 %v90
    %v178 = vunpack.c.l.b16 %v91
    %v179 = vunpack.c.l.b16 %v92
    %v180 = vunpack.c.l.b16 %v93
    %v181 = vunpack.c.l.b16 %v94
    %v182 = vunpack.c.l.b16 %v95
    %v183 = vunpack.c.l.b16 %v96
    %v184 = vunpack.c.l.b16 %v97
    %v185 = vpack.c.b16 %v154, %v153
    %v186 = vpack.c.b16 %v156, %v155
    %v187 = vpack.c.b16 %v158, %v157
    %v188 = vpack.c.b16 %v160, %v159
    %v189 = vpack.c.b16 %v162, %v161
    %v190 = vpack.c.b16 %v164, %v163
    %v191 = vpack.c.b16 %v166, %v165
    %v192 = vpack.c.b16 %v168, %v167
    %v193 = vpack.c.b16 %v170, %v169
    %v194 = vpack.c.b16 %v172, %v171
    %v195 = vpack.c.b16 %v174, %v173
    %v196 = vpack.c.b16 %v176, %v175
    %v197 = vpack.c.b16 %v178, %v177
    %v198 = vpack.c.b16 %v180, %v179
    %v199 = vpack.c.b16 %v182, %v181
    %v200 = vpack.c.b16 %v184, %v183
    %v233 = vunpack.c.l.b16 %v98
    %v234 = vunpack.c.l.b16 %v99
    %v235 = vunpack.c.l.b16 %v100
    %v236 = vunpack.c.l.b16 %v101
    %v237 = vunpack.c.l.b16 %v102
    %v238 = vunpack.c.l.b16 %v103
    %v239 = vunpack.c.l.b16 %v104
    %v240 = vunpack.c.l.b16 %v105
    %v241 = vunpack.c.l.b16 %v106
    %v242 = vunpack.c.l.b16 %v107
    %v243 = vunpack.c.l.b16 %v108
    %v244 = vunpack.c.l.b16 %v109
    %v245 = vunpack.c.l.b16 %v110
    %v246 = vunpack.c.l.b16 %v111
    %v247 = vunpack.c.l.b16 %v112
    %v248 = vunpack.c.l.b16 %v113
    %v249 = vpack.c.b16 %v234, %v233
    %v250 = vpack.c.b16 %v236, %v235
    %v251 = vpack.c.b16 %v238, %v237
    %v252 = vpack.c.b16 %v240, %v239
    %v253 = vpack.c.b16 %v242, %v241
    %v254 = vpack.c.b16 %v244, %v243
    %v255 = vpack.c.b16 %v246, %v245
    %v256 = vpack.c.b16 %v248, %v247
    %265 = vmatprep.subr.bf16.mxu0 0
    %266 = vmatpush1.bf16.msra.mxu0 %v249
    %267 = vmatprep.subr.bf16.mxu0 0
    %268 = vmatpush1.bf16.msra.mxu0 %v250
    %269 = vmatprep.subr.bf16.mxu0 0
    %270 = vmatpush1.bf16.msra.mxu0 %v251
    %271 = vmatprep.subr.bf16.mxu0 0
    %272 = vmatpush1.bf16.msra.mxu0 %v252
    %273 = vmatprep.subr.bf16.mxu0 0
    %274 = vmatpush1.bf16.msra.mxu0 %v253
    %275 = vmatprep.subr.bf16.mxu0 0
    %276 = vmatpush1.bf16.msra.mxu0 %v254
    %277 = vmatprep.subr.bf16.mxu0 0
    %278 = vmatpush1.bf16.msra.mxu0 %v255
    %279 = vmatprep.subr.bf16.mxu0 0
    %280 = vmatpush1.bf16.msra.mxu0 %v256
    %281 = vmatprep.subr.bf16.mxu0 0
    %282 = vmatpush1.bf16.msra.mxu0 0
    %283 = vmatprep.subr.bf16.mxu0 0
    %284 = vmatpush1.bf16.msra.mxu0 0
    %285 = vmatprep.subr.bf16.mxu0 0
    %286 = vmatpush1.bf16.msra.mxu0 0
    %287 = vmatprep.subr.bf16.mxu0 0
    %288 = vmatpush1.bf16.msra.mxu0 0
    %289 = vmatprep.subr.bf16.mxu0 0
    %290 = vmatpush1.bf16.msra.mxu0 0
    %291 = vmatprep.subr.bf16.mxu0 0
    %292 = vmatpush1.bf16.msra.mxu0 0
    %293 = vmatprep.subr.bf16.mxu0 0
    %294 = vmatpush1.bf16.msra.mxu0 0
    %295 = vmatprep.subr.bf16.mxu0 0
    %296 = vmatpush1.bf16.msra.mxu0 0
    %297 = vmatprep.mubr.bf16.mxu0 0
    %298 = vmatmul.mubr.bf16.gmra.mrb[0].mxu0 %v185
    %v299 = vpop.f32.mrb[0].mxu0
    %v300 = vadd.f32 %v119, %v299
    %v301 = vpop.f32.mrb[0].mxu0
    %v302 = vpop.f32.mrb[0].mxu0
    %v303 = vadd.f32 %v119, %v302
    %v304 = vpop.f32.mrb[0].mxu0
    %305 = vmatprep.mubr.bf16.mxu0 0
    %306 = vmatmul.mubr.bf16.gmra.mrb[0].mxu0 %v186
    %v307 = vpop.f32.mrb[0].mxu0
    %v308 = vadd.f32 %v119, %v307
    %v309 = vpop.f32.mrb[0].mxu0
    %v310 = vpop.f32.mrb[0].mxu0
    %v311 = vadd.f32 %v119, %v310
    %v312 = vpop.f32.mrb[0].mxu0
    %313 = vmatprep.mubr.bf16.mxu0 0
    %314 = vmatmul.mubr.bf16.gmra.mrb[0].mxu0 %v187
    %v315 = vpop.f32.mrb[0].mxu0
    %v316 = vadd.f32 %v119, %v315
    %v317 = vpop.f32.mrb[0].mxu0
    %v318 = vpop.f32.mrb[0].mxu0
    %v319 = vadd.f32 %v119, %v318
    %v320 = vpop.f32.mrb[0].mxu0
    %321 = vmatprep.mubr.bf16.mxu0 0
    %322 = vmatmul.mubr.bf16.gmra.mrb[0].mxu0 %v188
    %v323 = vpop.f32.mrb[0].mxu0
    %v324 = vadd.f32 %v119, %v323
    %v325 = vpop.f32.mrb[0].mxu0
    %v326 = vpop.f32.mrb[0].mxu0
    %v327 = vadd.f32 %v119, %v326
    %v328 = vpop.f32.mrb[0].mxu0
    %329 = vmatprep.mubr.bf16.mxu0 0
    %330 = vmatmul.mubr.bf16.gmra.mrb[0].mxu0 %v189
    %v331 = vpop.f32.mrb[0].mxu0
    %v332 = vadd.f32 %v119, %v331
    %v333 = vpop.f32.mrb[0].mxu0
    %v334 = vpop.f32.mrb[0].mxu0
    %v335 = vadd.f32 %v119, %v334
    %v336 = vpop.f32.mrb[0].mxu0
    %337 = vmatprep.mubr.bf16.mxu0 0
    %338 = vmatmul.mubr.bf16.gmra.mrb[0].mxu0 %v190
    %v339 = vpop.f32.mrb[0].mxu0
    %v340 = vadd.f32 %v119, %v339
    %v341 = vpop.f32.mrb[0].mxu0
    %v342 = vpop.f32.mrb[0].mxu0
    %v343 = vadd.f32 %v119, %v342
    %v344 = vpop.f32.mrb[0].mxu0
    %345 = vmatprep.mubr.bf16.mxu0 0
    %346 = vmatmul.mubr.bf16.gmra.mrb[0].mxu0 %v191
    %v347 = vpop.f32.mrb[0].mxu0
    %v348 = vadd.f32 %v119, %v347
    %v349 = vpop.f32.mrb[0].mxu0
    %v350 = vpop.f32.mrb[0].mxu0
    %v351 = vadd.f32 %v119, %v350
    %v352 = vpop.f32.mrb[0].mxu0
    %353 = vmatprep.mubr.bf16.mxu0 0
    %354 = vmatmul.mubr.bf16.gmra.mrb[0].mxu0 %v192
    %v355 = vpop.f32.mrb[0].mxu0
    %v356 = vadd.f32 %v119, %v355
    %v357 = vpop.f32.mrb[0].mxu0
    %v358 = vpop.f32.mrb[0].mxu0
    %v359 = vadd.f32 %v119, %v358
    %v360 = vpop.f32.mrb[0].mxu0
    %361 = vmatprep.mubr.bf16.mxu0 0
    %362 = vmatmul.mubr.bf16.gmra.mrb[0].mxu0 %v193
    %v363 = vpop.f32.mrb[0].mxu0
    %v364 = vadd.f32 %v119, %v363
    %v365 = vpop.f32.mrb[0].mxu0
    %v366 = vpop.f32.mrb[0].mxu0
    %v367 = vadd.f32 %v119, %v366
    %v368 = vpop.f32.mrb[0].mxu0
    %369 = vmatprep.mubr.bf16.mxu0 0
    %370 = vmatmul.mubr.bf16.gmra.mrb[0].mxu0 %v194
    %v371 = vpop.f32.mrb[0].mxu0
    %v372 = vadd.f32 %v119, %v371
    %v373 = vpop.f32.mrb[0].mxu0
    %v374 = vpop.f32.mrb[0].mxu0
    %v375 = vadd.f32 %v119, %v374
    %v376 = vpop.f32.mrb[0].mxu0
    %377 = vmatprep.mubr.bf16.mxu0 0
    %378 = vmatmul.mubr.bf16.gmra.mrb[0].mxu0 %v195
    %v379 = vpop.f32.mrb[0].mxu0
    %v380 = vadd.f32 %v119, %v379
    %v381 = vpop.f32.mrb[0].mxu0
    %v382 = vpop.f32.mrb[0].mxu0
    %v383 = vadd.f32 %v119, %v382
    %v384 = vpop.f32.mrb[0].mxu0
    %385 = vmatprep.mubr.bf16.mxu0 0
    %386 = vmatmul.mubr.bf16.gmra.mrb[0].mxu0 %v196
    %v387 = vpop.f32.mrb[0].mxu0
    %v388 = vadd.f32 %v119, %v387
    %v389 = vpop.f32.mrb[0].mxu0
    %v390 = vpop.f32.mrb[0].mxu0
    %v391 = vadd.f32 %v119, %v390
    %v392 = vpop.f32.mrb[0].mxu0
    %393 = vmatprep.mubr.bf16.mxu0 0
    %394 = vmatmul.mubr.bf16.gmra.mrb[0].mxu0 %v197
    %v395 = vpop.f32.mrb[0].mxu0
    %v396 = vadd.f32 %v119, %v395
    %v397 = vpop.f32.mrb[0].mxu0
    %v398 = vpop.f32.mrb[0].mxu0
    %v399 = vadd.f32 %v119, %v398
    %v400 = vpop.f32.mrb[0].mxu0
    %401 = vmatprep.mubr.bf16.mxu0 0
    %402 = vmatmul.mubr.bf16.gmra.mrb[0].mxu0 %v198
    %v403 = vpop.f32.mrb[0].mxu0
    %v404 = vadd.f32 %v119, %v403
    %v405 = vpop.f32.mrb[0].mxu0
    %v406 = vpop.f32.mrb[0].mxu0
    %v407 = vadd.f32 %v119, %v406
    %v408 = vpop.f32.mrb[0].mxu0
    %409 = vmatprep.mubr.bf16.mxu0 0
    %410 = vmatmul.mubr.bf16.gmra.mrb[0].mxu0 %v199
    %v411 = vpop.f32.mrb[0].mxu0
    %v412 = vadd.f32 %v119, %v411
    %v413 = vpop.f32.mrb[0].mxu0
    %v414 = vpop.f32.mrb[0].mxu0
    %v415 = vadd.f32 %v119, %v414
    %v416 = vpop.f32.mrb[0].mxu0
    %417 = vmatprep.mubr.bf16.mxu0 0
    %418 = vmatmul.mubr.bf16.gmra.mrb[0].mxu0 %v200
    %v419 = vpop.f32.mrb[0].mxu0
    %v420 = vadd.f32 %v119, %v419
    %v421 = vpop.f32.mrb[0].mxu0
    %v422 = vpop.f32.mrb[0].mxu0
    %v423 = vadd.f32 %v119, %v422
    %v424 = vpop.f32.mrb[0].mxu0
    %425 = vdwg.mxu0
    %v426 = vmax.f32 %v300, 0.0
    %v427 = vmax.f32 %v303, 0.0
    %v428 = vmax.f32 %v308, 0.0
    %v429 = vmax.f32 %v311, 0.0
    %v430 = vmax.f32 %v316, 0.0
    %v431 = vmax.f32 %v319, 0.0
    %v432 = vmax.f32 %v324, 0.0
    %v433 = vmax.f32 %v327, 0.0
    %v434 = vmax.f32 %v332, 0.0
    %v435 = vmax.f32 %v335, 0.0
    %v436 = vmax.f32 %v340, 0.0
    %v437 = vmax.f32 %v343, 0.0
    %v438 = vmax.f32 %v348, 0.0
    %v439 = vmax.f32 %v351, 0.0
    %v440 = vmax.f32 %v356, 0.0
    %v441 = vmax.f32 %v359, 0.0
    %v442 = vmax.f32 %v364, 0.0
    %v443 = vmax.f32 %v367, 0.0
    %v444 = vmax.f32 %v372, 0.0
    %v445 = vmax.f32 %v375, 0.0
    %v446 = vmax.f32 %v380, 0.0
    %v447 = vmax.f32 %v383, 0.0
    %v448 = vmax.f32 %v388, 0.0
    %v449 = vmax.f32 %v391, 0.0
    %v450 = vmax.f32 %v396, 0.0
    %v451 = vmax.f32 %v399, 0.0
    %v452 = vmax.f32 %v404, 0.0
    %v453 = vmax.f32 %v407, 0.0
    %v454 = vmax.f32 %v412, 0.0
    %v455 = vmax.f32 %v415, 0.0
    %v456 = vmax.f32 %v420, 0.0
    %v457 = vmax.f32 %v423, 0.0
    %v458 = vpack.c.bf16 %v427, %v426
    %v459 = vpack.c.bf16 %v429, %v428
    %v460 = vpack.c.bf16 %v431, %v430
    %v461 = vpack.c.bf16 %v433, %v432
    %v462 = vpack.c.bf16 %v435, %v434
    %v463 = vpack.c.bf16 %v437, %v436
    %v464 = vpack.c.bf16 %v439, %v438
    %v465 = vpack.c.bf16 %v441, %v440
    %v466 = vpack.c.bf16 %v443, %v442
    %v467 = vpack.c.bf16 %v445, %v444
    %v468 = vpack.c.bf16 %v447, %v446
    %v469 = vpack.c.bf16 %v449, %v448
    %v470 = vpack.c.bf16 %v451, %v450
    %v471 = vpack.c.bf16 %v453, %v452
    %v472 = vpack.c.bf16 %v455, %v454
    %v473 = vpack.c.bf16 %v457, %v456
    %v474 = vld [vmem:[#allocation7] sm:$0xf]
    %v475 = vld [vmem:[#allocation7 + $0x4] sm:$0xf]
    %v476 = vld [vmem:[#allocation7 + $0x8] sm:$0xf]
    %v477 = vld [vmem:[#allocation7 + $0xc] sm:$0xf]
    %v478 = vld [vmem:[#allocation7 + $0x10] sm:$0xf]
    %v479 = vld [vmem:[#allocation7 + $0x14] sm:$0xf]
    %v480 = vld [vmem:[#allocation7 + $0x18] sm:$0xf]
    %v481 = vld [vmem:[#allocation7 + $0x1c] sm:$0xf]
    %v482 = vld [vmem:[#allocation7 + $0x20] sm:$0xf]
    %v483 = vld [vmem:[#allocation7 + $0x24] sm:$0xf]
    %v484 = vld [vmem:[#allocation7 + $0x28] sm:$0xf]
    %v485 = vld [vmem:[#allocation7 + $0x2c] sm:$0xf]
    %v486 = vld [vmem:[#allocation7 + $0x30] sm:$0xf]
    %v487 = vld [vmem:[#allocation7 + $0x34] sm:$0xf]
    %v488 = vld [vmem:[#allocation7 + $0x38] sm:$0xf]
    %v489 = vld [vmem:[#allocation7 + $0x3c] sm:$0xf]
    %v490 = vld [vmem:[%s4] sm:$0x1]
    %v492 = vlaneseq
    %v493 = vshrl.u32 %v492, 7
    %v494 = vsub.s32 0, %v493
    %v495 = vrot.slane %v490, %v494
    %v513 = vunpack.c.l.b16 %v474
    %v514 = vunpack.c.l.b16 %v475
    %v515 = vunpack.c.l.b16 %v476
    %v516 = vunpack.c.l.b16 %v477
    %v517 = vunpack.c.l.b16 %v478
    %v518 = vunpack.c.l.b16 %v479
    %v519 = vunpack.c.l.b16 %v480
    %v520 = vunpack.c.l.b16 %v481
    %v521 = vunpack.c.l.b16 %v482
    %v522 = vunpack.c.l.b16 %v483
    %v523 = vunpack.c.l.b16 %v484
    %v524 = vunpack.c.l.b16 %v485
    %v525 = vunpack.c.l.b16 %v486
    %v526 = vunpack.c.l.b16 %v487
    %v527 = vunpack.c.l.b16 %v488
    %v528 = vunpack.c.l.b16 %v489
    %v529 = vpack.c.b16 %v514, %v513
    %v530 = vpack.c.b16 %v516, %v515
    %v531 = vpack.c.b16 %v518, %v517
    %v532 = vpack.c.b16 %v520, %v519
    %v533 = vpack.c.b16 %v522, %v521
    %v534 = vpack.c.b16 %v524, %v523
    %v535 = vpack.c.b16 %v526, %v525
    %v536 = vpack.c.b16 %v528, %v527
    %545 = vmatprep.subr.bf16.mxu0 0
    %546 = vmatpush1.bf16.msra.mxu0 %v529
    %547 = vmatprep.subr.bf16.mxu0 0
    %548 = vmatpush1.bf16.msra.mxu0 %v530
    %549 = vmatprep.subr.bf16.mxu0 0
    %550 = vmatpush1.bf16.msra.mxu0 %v531
    %551 = vmatprep.subr.bf16.mxu0 0
    %552 = vmatpush1.bf16.msra.mxu0 %v532
    %553 = vmatprep.subr.bf16.mxu0 0
    %554 = vmatpush1.bf16.msra.mxu0 %v533
    %555 = vmatprep.subr.bf16.mxu0 0
    %556 = vmatpush1.bf16.msra.mxu0 %v534
    %557 = vmatprep.subr.bf16.mxu0 0
    %558 = vmatpush1.bf16.msra.mxu0 %v535
    %559 = vmatprep.subr.bf16.mxu0 0
    %560 = vmatpush1.bf16.msra.mxu0 %v536
    %561 = vmatprep.subr.bf16.mxu0 0
    %562 = vmatpush1.bf16.msra.mxu0 0
    %563 = vmatprep.subr.bf16.mxu0 0
    %564 = vmatpush1.bf16.msra.mxu0 0
    %565 = vmatprep.subr.bf16.mxu0 0
    %566 = vmatpush1.bf16.msra.mxu0 0
    %567 = vmatprep.subr.bf16.mxu0 0
    %568 = vmatpush1.bf16.msra.mxu0 0
    %569 = vmatprep.subr.bf16.mxu0 0
    %570 = vmatpush1.bf16.msra.mxu0 0
    %571 = vmatprep.subr.bf16.mxu0 0
    %572 = vmatpush1.bf16.msra.mxu0 0
    %573 = vmatprep.subr.bf16.mxu0 0
    %574 = vmatpush1.bf16.msra.mxu0 0
    %575 = vmatprep.subr.bf16.mxu0 0
    %576 = vmatpush1.bf16.msra.mxu0 0
    %577 = vmatprep.mubr.bf16.mxu0 0
    %578 = vmatmul.mubr.bf16.gmra.mrb[0].mxu0 %v458
    %v579 = vpop.f32.mrb[0].mxu0
    %v580 = vadd.f32 %v495, %v579
    %v581 = vpop.f32.mrb[0].mxu0
    %v582 = vpop.f32.mrb[0].mxu0
    %v583 = vadd.f32 %v495, %v582
    %v584 = vpop.f32.mrb[0].mxu0
    %585 = vmatprep.mubr.bf16.mxu0 0
    %586 = vmatmul.mubr.bf16.gmra.mrb[0].mxu0 %v459
    %v587 = vpop.f32.mrb[0].mxu0
    %v588 = vadd.f32 %v495, %v587
    %v589 = vpop.f32.mrb[0].mxu0
    %v590 = vpop.f32.mrb[0].mxu0
    %v591 = vadd.f32 %v495, %v590
    %v592 = vpop.f32.mrb[0].mxu0
    %593 = vmatprep.mubr.bf16.mxu0 0
    %594 = vmatmul.mubr.bf16.gmra.mrb[0].mxu0 %v460
    %v595 = vpop.f32.mrb[0].mxu0
    %v596 = vadd.f32 %v495, %v595
    %v597 = vpop.f32.mrb[0].mxu0
    %v598 = vpop.f32.mrb[0].mxu0
    %v599 = vadd.f32 %v495, %v598
    %v600 = vpop.f32.mrb[0].mxu0
    %601 = vmatprep.mubr.bf16.mxu0 0
    %602 = vmatmul.mubr.bf16.gmra.mrb[0].mxu0 %v461
    %v603 = vpop.f32.mrb[0].mxu0
    %v604 = vadd.f32 %v495, %v603
    %v605 = vpop.f32.mrb[0].mxu0
    %v606 = vpop.f32.mrb[0].mxu0
    %v607 = vadd.f32 %v495, %v606
    %v608 = vpop.f32.mrb[0].mxu0
    %609 = vmatprep.mubr.bf16.mxu0 0
    %610 = vmatmul.mubr.bf16.gmra.mrb[0].mxu0 %v462
    %v611 = vpop.f32.mrb[0].mxu0
    %v612 = vadd.f32 %v495, %v611
    %v613 = vpop.f32.mrb[0].mxu0
    %v614 = vpop.f32.mrb[0].mxu0
    %v615 = vadd.f32 %v495, %v614
    %v616 = vpop.f32.mrb[0].mxu0
    %617 = vmatprep.mubr.bf16.mxu0 0
    %618 = vmatmul.mubr.bf16.gmra.mrb[0].mxu0 %v463
    %v619 = vpop.f32.mrb[0].mxu0
    %v620 = vadd.f32 %v495, %v619
    %v621 = vpop.f32.mrb[0].mxu0
    %v622 = vpop.f32.mrb[0].mxu0
    %v623 = vadd.f32 %v495, %v622
    %v624 = vpop.f32.mrb[0].mxu0
    %625 = vmatprep.mubr.bf16.mxu0 0
    %626 = vmatmul.mubr.bf16.gmra.mrb[0].mxu0 %v464
    %v627 = vpop.f32.mrb[0].mxu0
    %v628 = vadd.f32 %v495, %v627
    %v629 = vpop.f32.mrb[0].mxu0
    %v630 = vpop.f32.mrb[0].mxu0
    %v631 = vadd.f32 %v495, %v630
    %v632 = vpop.f32.mrb[0].mxu0
    %633 = vmatprep.mubr.bf16.mxu0 0
    %634 = vmatmul.mubr.bf16.gmra.mrb[0].mxu0 %v465
    %v635 = vpop.f32.mrb[0].mxu0
    %v636 = vadd.f32 %v495, %v635
    %v637 = vpop.f32.mrb[0].mxu0
    %v638 = vpop.f32.mrb[0].mxu0
    %v639 = vadd.f32 %v495, %v638
    %v640 = vpop.f32.mrb[0].mxu0
    %641 = vmatprep.mubr.bf16.mxu0 0
    %642 = vmatmul.mubr.bf16.gmra.mrb[0].mxu0 %v466
    %v643 = vpop.f32.mrb[0].mxu0
    %v644 = vadd.f32 %v495, %v643
    %v645 = vpop.f32.mrb[0].mxu0
    %v646 = vpop.f32.mrb[0].mxu0
    %v647 = vadd.f32 %v495, %v646
    %v648 = vpop.f32.mrb[0].mxu0
    %649 = vmatprep.mubr.bf16.mxu0 0
    %650 = vmatmul.mubr.bf16.gmra.mrb[0].mxu0 %v467
    %v651 = vpop.f32.mrb[0].mxu0
    %v652 = vadd.f32 %v495, %v651
    %v653 = vpop.f32.mrb[0].mxu0
    %v654 = vpop.f32.mrb[0].mxu0
    %v655 = vadd.f32 %v495, %v654
    %v656 = vpop.f32.mrb[0].mxu0
    %657 = vmatprep.mubr.bf16.mxu0 0
    %658 = vmatmul.mubr.bf16.gmra.mrb[0].mxu0 %v468
    %v659 = vpop.f32.mrb[0].mxu0
    %v660 = vadd.f32 %v495, %v659
    %v661 = vpop.f32.mrb[0].mxu0
    %v662 = vpop.f32.mrb[0].mxu0
    %v663 = vadd.f32 %v495, %v662
    %v664 = vpop.f32.mrb[0].mxu0
    %665 = vmatprep.mubr.bf16.mxu0 0
    %666 = vmatmul.mubr.bf16.gmra.mrb[0].mxu0 %v469
    %v667 = vpop.f32.mrb[0].mxu0
    %v668 = vadd.f32 %v495, %v667
    %v669 = vpop.f32.mrb[0].mxu0
    %v670 = vpop.f32.mrb[0].mxu0
    %v671 = vadd.f32 %v495, %v670
    %v672 = vpop.f32.mrb[0].mxu0
    %673 = vmatprep.mubr.bf16.mxu0 0
    %674 = vmatmul.mubr.bf16.gmra.mrb[0].mxu0 %v470
    %v675 = vpop.f32.mrb[0].mxu0
    %v676 = vadd.f32 %v495, %v675
    %v677 = vpop.f32.mrb[0].mxu0
    %v678 = vpop.f32.mrb[0].mxu0
    %v679 = vadd.f32 %v495, %v678
    %v680 = vpop.f32.mrb[0].mxu0
    %681 = vmatprep.mubr.bf16.mxu0 0
    %682 = vmatmul.mubr.bf16.gmra.mrb[0].mxu0 %v471
    %v683 = vpop.f32.mrb[0].mxu0
    %v684 = vadd.f32 %v495, %v683
    %v685 = vpop.f32.mrb[0].mxu0
    %v686 = vpop.f32.mrb[0].mxu0
    %v687 = vadd.f32 %v495, %v686
    %v688 = vpop.f32.mrb[0].mxu0
    %689 = vmatprep.mubr.bf16.mxu0 0
    %690 = vmatmul.mubr.bf16.gmra.mrb[0].mxu0 %v472
    %v691 = vpop.f32.mrb[0].mxu0
    %v692 = vadd.f32 %v495, %v691
    %v693 = vpop.f32.mrb[0].mxu0
    %v694 = vpop.f32.mrb[0].mxu0
    %v695 = vadd.f32 %v495, %v694
    %v696 = vpop.f32.mrb[0].mxu0
    %697 = vmatprep.mubr.bf16.mxu0 0
    %698 = vmatmul.mubr.bf16.gmra.mrb[0].mxu0 %v473
    %v699 = vpop.f32.mrb[0].mxu0
    %v700 = vadd.f32 %v495, %v699
    %v701 = vpop.f32.mrb[0].mxu0
    %v702 = vpop.f32.mrb[0].mxu0
    %v703 = vadd.f32 %v495, %v702
    %v704 = vpop.f32.mrb[0].mxu0
    %705 = vdwg.mxu0
    %706 = vst [vmem:[#allocation8] sm:$0xff] %v580
    %707 = vst [vmem:[#allocation8 + $0x8] sm:$0xff] %v583
    %708 = vst [vmem:[#allocation8 + $0x10] sm:$0xff] %v588
    %709 = vst [vmem:[#allocation8 + $0x18] sm:$0xff] %v591
    %710 = vst [vmem:[#allocation8 + $0x20] sm:$0xff] %v596
    %711 = vst [vmem:[#allocation8 + $0x28] sm:$0xff] %v599
    %712 = vst [vmem:[#allocation8 + $0x30] sm:$0xff] %v604
    %713 = vst [vmem:[#allocation8 + $0x38] sm:$0xff] %v607
    %714 = vst [vmem:[#allocation8 + $0x40] sm:$0xff] %v612
    %715 = vst [vmem:[#allocation8 + $0x48] sm:$0xff] %v615
    %716 = vst [vmem:[#allocation8 + $0x50] sm:$0xff] %v620
    %717 = vst [vmem:[#allocation8 + $0x58] sm:$0xff] %v623
    %718 = vst [vmem:[#allocation8 + $0x60] sm:$0xff] %v628
    %719 = vst [vmem:[#allocation8 + $0x68] sm:$0xff] %v631
    %720 = vst [vmem:[#allocation8 + $0x70] sm:$0xff] %v636
    %721 = vst [vmem:[#allocation8 + $0x78] sm:$0xff] %v639
    %722 = vst [vmem:[#allocation8 + $0x80] sm:$0xff] %v644
    %723 = vst [vmem:[#allocation8 + $0x88] sm:$0xff] %v647
    %724 = vst [vmem:[#allocation8 + $0x90] sm:$0xff] %v652
    %725 = vst [vmem:[#allocation8 + $0x98] sm:$0xff] %v655
    %726 = vst [vmem:[#allocation8 + $0xa0] sm:$0xff] %v660
    %727 = vst [vmem:[#allocation8 + $0xa8] sm:$0xff] %v663
    %728 = vst [vmem:[#allocation8 + $0xb0] sm:$0xff] %v668
    %729 = vst [vmem:[#allocation8 + $0xb8] sm:$0xff] %v671
    %730 = vst [vmem:[#allocation8 + $0xc0] sm:$0xff] %v676
    %731 = vst [vmem:[#allocation8 + $0xc8] sm:$0xff] %v679
    %732 = vst [vmem:[#allocation8 + $0xd0] sm:$0xff] %v684
    %733 = vst [vmem:[#allocation8 + $0xd8] sm:$0xff] %v687
    %734 = vst [vmem:[#allocation8 + $0xe0] sm:$0xff] %v692
    %735 = vst [vmem:[#allocation8 + $0xe8] sm:$0xff] %v695
    %736 = vst [vmem:[#allocation8 + $0xf0] sm:$0xff] %v700
    %737 = vst [vmem:[#allocation8 + $0xf8] sm:$0xff] %v703
    %v738 = vpack.c.bf16 %v583, %v580
    %v739 = vpack.c.bf16 %v591, %v588
    %v740 = vpack.c.bf16 %v599, %v596
    %v741 = vpack.c.bf16 %v607, %v604
    %v742 = vpack.c.bf16 %v615, %v612
    %v743 = vpack.c.bf16 %v623, %v620
    %v744 = vpack.c.bf16 %v631, %v628
    %v745 = vpack.c.bf16 %v639, %v636
    %v746 = vpack.c.bf16 %v647, %v644
    %v747 = vpack.c.bf16 %v655, %v652
    %v748 = vpack.c.bf16 %v663, %v660
    %v749 = vpack.c.bf16 %v671, %v668
    %v750 = vpack.c.bf16 %v679, %v676
    %v751 = vpack.c.bf16 %v687, %v684
    %v752 = vpack.c.bf16 %v695, %v692
    %v753 = vpack.c.bf16 %v703, %v700
    %v770 = vunpack.c.l.b16 %v738
    %v771 = vunpack.c.h.b16 %v738
    %v772 = vunpack.c.l.b16 %v739
    %v773 = vunpack.c.h.b16 %v739
    %v774 = vunpack.c.l.b16 %v740
    %v775 = vunpack.c.h.b16 %v740
    %v776 = vunpack.c.l.b16 %v741
    %v777 = vunpack.c.h.b16 %v741
    %v778 = vunpack.c.l.b16 %v742
    %v779 = vunpack.c.h.b16 %v742
    %v780 = vunpack.c.l.b16 %v743
    %v781 = vunpack.c.h.b16 %v743
    %v782 = vunpack.c.l.b16 %v744
    %v783 = vunpack.c.h.b16 %v744
    %v784 = vunpack.c.l.b16 %v745
    %v785 = vunpack.c.h.b16 %v745
    %v786 = vunpack.c.l.b16 %v746
    %v787 = vunpack.c.h.b16 %v746
    %v788 = vunpack.c.l.b16 %v747
    %v789 = vunpack.c.h.b16 %v747
    %v790 = vunpack.c.l.b16 %v748
    %v791 = vunpack.c.h.b16 %v748
    %v792 = vunpack.c.l.b16 %v749
    %v793 = vunpack.c.h.b16 %v749
    %v794 = vunpack.c.l.b16 %v750
    %v795 = vunpack.c.h.b16 %v750
    %v796 = vunpack.c.l.b16 %v751
    %v797 = vunpack.c.h.b16 %v751
    %v798 = vunpack.c.l.b16 %v752
    %v799 = vunpack.c.h.b16 %v752
    %v800 = vunpack.c.l.b16 %v753
    %v801 = vunpack.c.h.b16 %v753
    %v802 = vpack.c.b16 %v770, %v770
    %v803 = vpack.c.b16 %v771, %v771
    %v804 = vpack.c.b16 %v772, %v772
    %v805 = vpack.c.b16 %v773, %v773
    %v806 = vpack.c.b16 %v774, %v774
    %v807 = vpack.c.b16 %v775, %v775
    %v808 = vpack.c.b16 %v776, %v776
    %v809 = vpack.c.b16 %v777, %v777
    %v810 = vpack.c.b16 %v778, %v778
    %v811 = vpack.c.b16 %v779, %v779
    %v812 = vpack.c.b16 %v780, %v780
    %v813 = vpack.c.b16 %v781, %v781
    %v814 = vpack.c.b16 %v782, %v782
    %v815 = vpack.c.b16 %v783, %v783
    %v816 = vpack.c.b16 %v784, %v784
    %v817 = vpack.c.b16 %v785, %v785
    %v818 = vpack.c.b16 %v786, %v786
    %v819 = vpack.c.b16 %v787, %v787
    %v820 = vpack.c.b16 %v788, %v788
    %v821 = vpack.c.b16 %v789, %v789
    %v822 = vpack.c.b16 %v790, %v790
    %v823 = vpack.c.b16 %v791, %v791
    %v824 = vpack.c.b16 %v792, %v792
    %v825 = vpack.c.b16 %v793, %v793
    %v826 = vpack.c.b16 %v794, %v794
    %v827 = vpack.c.b16 %v795, %v795
    %v828 = vpack.c.b16 %v796, %v796
    %v829 = vpack.c.b16 %v797, %v797
    %v830 = vpack.c.b16 %v798, %v798
    %v831 = vpack.c.b16 %v799, %v799
    %v832 = vpack.c.b16 %v800, %v800
    %v833 = vpack.c.b16 %v801, %v801
    %866 = vst [vmem:[#allocation9] sm:$0xf] %v802
    %867 = vst [vmem:[#allocation9 + $0x4] sm:$0xf] %v803
    %868 = vst [vmem:[#allocation9 + $0x8] sm:$0xf] %v804
    %869 = vst [vmem:[#allocation9 + $0xc] sm:$0xf] %v805
    %870 = vst [vmem:[#allocation9 + $0x10] sm:$0xf] %v806
    %871 = vst [vmem:[#allocation9 + $0x14] sm:$0xf] %v807
    %872 = vst [vmem:[#allocation9 + $0x18] sm:$0xf] %v808
    %873 = vst [vmem:[#allocation9 + $0x1c] sm:$0xf] %v809
    %874 = vst [vmem:[#allocation9 + $0x20] sm:$0xf] %v810
    %875 = vst [vmem:[#allocation9 + $0x24] sm:$0xf] %v811
    %876 = vst [vmem:[#allocation9 + $0x28] sm:$0xf] %v812
    %877 = vst [vmem:[#allocation9 + $0x2c] sm:$0xf] %v813
    %878 = vst [vmem:[#allocation9 + $0x30] sm:$0xf] %v814
    %879 = vst [vmem:[#allocation9 + $0x34] sm:$0xf] %v815
    %880 = vst [vmem:[#allocation9 + $0x38] sm:$0xf] %v816
    %881 = vst [vmem:[#allocation9 + $0x3c] sm:$0xf] %v817
    %882 = vst [vmem:[#allocation9 + $0x40] sm:$0xf] %v818
    %883 = vst [vmem:[#allocation9 + $0x44] sm:$0xf] %v819
    %884 = vst [vmem:[#allocation9 + $0x48] sm:$0xf] %v820
    %885 = vst [vmem:[#allocation9 + $0x4c] sm:$0xf] %v821
    %886 = vst [vmem:[#allocation9 + $0x50] sm:$0xf] %v822
    %887 = vst [vmem:[#allocation9 + $0x54] sm:$0xf] %v823
    %888 = vst [vmem:[#allocation9 + $0x58] sm:$0xf] %v824
    %889 = vst [vmem:[#allocation9 + $0x5c] sm:$0xf] %v825
    %890 = vst [vmem:[#allocation9 + $0x60] sm:$0xf] %v826
    %891 = vst [vmem:[#allocation9 + $0x64] sm:$0xf] %v827
    %892 = vst [vmem:[#allocation9 + $0x68] sm:$0xf] %v828
    %893 = vst [vmem:[#allocation9 + $0x6c] sm:$0xf] %v829
    %894 = vst [vmem:[#allocation9 + $0x70] sm:$0xf] %v830
    %895 = vst [vmem:[#allocation9 + $0x74] sm:$0xf] %v831
    %896 = vst [vmem:[#allocation9 + $0x78] sm:$0xf] %v832
    %897 = vst [vmem:[#allocation9 + $0x7c] sm:$0xf] %v833
    // Predicated region
    $region34: #{tpu_custom_call.1} parent=1 // pred_check
      _
    $region35: #{tpu_custom_call.1} parent=1 // pred_check_branch
      %899 = sbr.rel (0) target = $region37
    $region36: #{tpu_custom_call.1} parent=1 // pred_region
      %s901 = ssub.s32 4096, 4096
      %902 = vsyncadd [#allocation4], %s901
      %s903 = sshll.u32 [#allocation8], 4
      %s904 = int_to_ptr.vmem [resolvable:$true] %s903
      %909 = dma.vmem_to_hbm [thread:$0]  %s904, 4096, %s5, [#allocation4], 128, 128, 8
    $region37: #{tpu_custom_call.1} parent=1 // pred_fallthru
      _
    // Predicated region
    $region38: #{tpu_custom_call.1} parent=1 // pred_check
      _
    $region39: #{tpu_custom_call.1} parent=1 // pred_check_branch
      %911 = sbr.rel (0) target = $region41
    $region40: #{tpu_custom_call.1} parent=1 // pred_region
      %s913 = ssub.s32 2048, 2048
      %914 = vsyncadd [#allocation10], %s913
      %s915 = sshll.u32 [#allocation9], 4
      %s916 = int_to_ptr.vmem [resolvable:$true] %s915
      %921 = dma.vmem_to_hbm [thread:$0]  %s916, 2048, %s6, [#allocation10], 64, 64, 4
    $region41: #{tpu_custom_call.1} parent=1 // pred_fallthru
      _
    // Predicated region
    $region42: #{tpu_custom_call.1} parent=1 // pred_check
      _
    $region43: #{tpu_custom_call.1} parent=1 // pred_check_branch
      %923 = sbr.rel (0) target = $region45
    $region44: #{tpu_custom_call.1} parent=1 // pred_region
      %924 = dma.done [#allocation4], 4096
    $region45: #{tpu_custom_call.1} parent=1 // pred_fallthru
      _
    // Predicated region
    $region46: #{tpu_custom_call.1} parent=1 // pred_check
      _
    $region47: #{tpu_custom_call.1} parent=1 // pred_check_branch
      %926 = sbr.rel (0) target = $region49
    $region48: #{tpu_custom_call.1} parent=1 // pred_region
      %927 = dma.done [#allocation10], 2048
    $region49: #{tpu_custom_call.1} parent=1 // pred_fallthru
      _
    %928 = vsyncpa [#allocation3], 1
    %929 = vsyncpa [#allocation6], 1
    %930 = vsyncpa [#allocation4], 1
    %931 = vsyncpa [#allocation10], 1

</llo_original>
